<compile_context>
chip_gen: v5e
topology: v5e:2x2
jax: 0.10.0
libtpu: 0.0.40
codegen_flags: <defaults>
</compile_context>

<pallas_src>
import functools

import jax
import jax.numpy as jnp
from jax.experimental import pallas as pl
from jax.experimental.pallas import tpu as pltpu

LANES = 128
SUBLANES = 8


def _round_up(x, m):
    return ((x + m - 1) // m) * m


def _bce_kernel(p_ref, t_ref, o_ref, acc_ref, *, eps, last_block, tail_valid,
                uniform):
    c = pl.program_id(0)            # part index (TensorCore on v7x megacore)
    i = pl.program_id(1)            # block index within this part
    n_inner = pl.num_programs(1)
    g = c * n_inner + i             # global block index

    @pl.when(i == 0)
    def _():
        acc_ref[...] = jnp.zeros_like(acc_ref)

    p = p_ref[...].astype(jnp.float32)
    t = t_ref[...].astype(jnp.float32)
    tmp = t * jnp.log(p + eps) + (1.0 - t) * jnp.log(1.0 - p + eps)

    block_rows, lanes = tmp.shape

    def _accumulate(vals):
        # Reduce the block down to one (8, 128) vreg worth of partial sums
        # (pure VPU adds); the full cross-lane reduce happens only at the end.
        acc_ref[...] += vals.reshape(block_rows // SUBLANES, SUBLANES,
                                     lanes).sum(axis=0)

    if uniform:
        # Every block is completely filled with valid elements: no masking.
        _accumulate(tmp)
    else:
        # Steady state: fully-valid blocks, no masking work at all.
        @pl.when(g < last_block)
        def _():
            _accumulate(tmp)

        # The single partially-valid block: mask padded / out-of-range lanes.
        @pl.when(g == last_block)
        def _():
            row_idx = jax.lax.broadcasted_iota(jnp.int32, (block_rows, lanes), 0)
            lane_idx = jax.lax.broadcasted_iota(jnp.int32, (block_rows, lanes), 1)
            local = row_idx * lanes + lane_idx          # index within block
            _accumulate(jnp.where(local < tail_valid, tmp, 0.0))

        # Blocks with g > last_block (at most one, clamped duplicates) hold no
        # valid data and are skipped entirely.

    @pl.when(i == n_inner - 1)
    def _():
        o_ref[0, 0] = jnp.sum(acc_ref[...])             # per-part partial sum


def bce_pallas(preds, targets, eps=1e-6, *, block_rows=2048):
    """Computes -mean(t*log(p+eps) + (1-t)*log(1-p+eps)) with a Pallas kernel."""
    p_flat = preds.reshape(-1)          # keep native dtype; upcast in-kernel
    t_flat = targets.reshape(-1)
    n = int(p_flat.shape[0])

    rows_unpadded = -(-n // LANES)      # cdiv(n, 128)

    if rows_unpadded >= block_rows:
        # Large input: at most a <=127-element pad so the 1-D view reshapes to
        # (rows, 128); the ragged last *block* is masked in-kernel, so no
        # pad-to-block-multiple copy of the whole array is needed.
        blk_rows = block_rows
        n_target = _round_up(n, LANES)
    else:
        # Small input: a single block; round rows to a sublane multiple and
        # pad (cheap -- whole array is < 1 MiB here).
        blk_rows = max(SUBLANES, _round_up(rows_unpadded, SUBLANES))
        n_target = blk_rows * LANES

    if n_target != n:
        # TODO(synk): for huge inputs with n % 128 != 0 this pad is a full HBM
        # copy; a separate 1-D tail pass would avoid it if it ever matters.
        pad = n_target - n
        p_flat = jnp.pad(p_flat, (0, pad), constant_values=0.5)
        t_flat = jnp.pad(t_flat, (0, pad), constant_values=0.0)

    rows = n_target // LANES
    p2d = p_flat.reshape(rows, LANES)
    t2d = t_flat.reshape(rows, LANES)

    block_elems = blk_rows * LANES
    num_blocks = -(-rows // blk_rows)            # blocks that hold any data
    num_parts = 2 if num_blocks > 1 else 1       # split across TCs (v7x)
    bpp = -(-num_blocks // num_parts)            # blocks per part
    last_block = num_blocks - 1
    tail_valid = n - last_block * block_elems    # valid elems in last block
    uniform = (tail_valid == block_elems) and (bpp * num_parts == num_blocks)

    kernel = functools.partial(
        _bce_kernel, eps=float(eps), last_block=last_block,
        tail_valid=tail_valid, uniform=uniform)

    def in_map(c, i):
        g = c * bpp + i
        # Clamp so the index_map never points past the (possibly ragged)
        # array; clamped duplicate blocks are never accumulated by the kernel.
        return (jnp.minimum(g, last_block), 0)

    out = pl.pallas_call(
        kernel,
        out_shape=jax.ShapeDtypeStruct((num_parts, 1), jnp.float32),
        grid_spec=pltpu.PrefetchScalarGridSpec(
            num_scalar_prefetch=0,
            grid=(num_parts, bpp),
            in_specs=[
                pl.BlockSpec((blk_rows, LANES), in_map),
                pl.BlockSpec((blk_rows, LANES), in_map),
            ],
            out_specs=pl.BlockSpec(
                (1, 1), lambda c, i: (c, 0), memory_space=pltpu.SMEM
            ),
            scratch_shapes=[pltpu.VMEM((SUBLANES, LANES), jnp.float32)],
        ),
        compiler_params=pltpu.CompilerParams(
            dimension_semantics=("parallel", "arbitrary")
        ),
    )(p2d, t2d)

    # Combine per-part partial sums; negate and take the mean (tiny XLA op).
    return -jnp.sum(out) / jnp.float32(n)


if __name__ == "__main__":
    key = jax.random.PRNGKey(0)
    k1, k2 = jax.random.split(key)

    # Small shapes consistent with a typical segmentation-style BCE input.
    shape = (2, 4, 16, 16)
    preds = jax.random.uniform(k1, shape, dtype=jnp.float32,
                               minval=0.01, maxval=0.99)
    targets = (jax.random.uniform(k2, shape, dtype=jnp.float32) > 0.5).astype(
        jnp.float32)

    out = bce_pallas(preds, targets)
    out = jax.block_until_ready(out)

    # Reference check in plain JAX (same math as the PyTorch module).
    eps = 1e-6
    p = preds.reshape(-1)
    t = targets.reshape(-1)
    ref = -jnp.mean(t * jnp.log(p + eps) + (1.0 - t) * jnp.log(1.0 - p + eps))

    assert jnp.allclose(out, ref, rtol=1e-5, atol=1e-6), (out, ref)
    print("KERNEL_OK")
</pallas_src>

<mosaic_0001>
module attributes {stable_mosaic.version = 11 : i64} {
  func.func @_bce_kernel(%arg0: i32, %arg1: i32, %arg2: memref<16x128xf32, #tpu.memory_space<vmem>>, %arg3: memref<16x128xf32, #tpu.memory_space<vmem>>, %arg4: memref<1x1xf32, #tpu.memory_space<smem>>, %arg5: memref<8x128xf32, #tpu.memory_space<vmem>>) attributes {dimension_semantics = [#tpu.dimension_semantics<parallel>, #tpu.dimension_semantics<arbitrary>], iteration_bounds = array<i64: 1, 1>, scalar_prefetch = 0 : i64, scratch_operands = 1 : i64, tpu.core_type = #tpu.core_type<tc>, window_params = [{transform_indices = @transform_0, window_bounds = array<i64: 16, 128>}, {transform_indices = @transform_1, window_bounds = array<i64: 16, 128>}, {transform_indices = @transform_2, window_bounds = array<i64: 1, 1>}]} {
    %c0_i32 = arith.constant 0 : i32
    %0 = arith.cmpi eq, %arg1, %c0_i32 : i32
    %1 = arith.extui %0 : i1 to i32
    %c0_i32_0 = arith.constant 0 : i32
    %2 = arith.cmpi ne, %1, %c0_i32_0 : i32
    scf.if %2 {
      %cst_14 = arith.constant 0.000000e+00 : f32
      %26 = vector.broadcast %cst_14 : f32 to vector<8x128xf32>
      %c0_15 = arith.constant 0 : index
      %c0_16 = arith.constant 0 : index
      %27 = vector.load %arg5[%c0_15, %c0_16] : memref<8x128xf32, #tpu.memory_space<vmem>>, vector<8x128xf32>
      tpu.vector_store %arg5[%c0_15, %c0_16], %26 {strides = array<i32>} : memref<8x128xf32, #tpu.memory_space<vmem>>, vector<8x128xf32>,
    } else {
    }
    %c0 = arith.constant 0 : index
    %c0_1 = arith.constant 0 : index
    %3 = vector.load %arg2[%c0, %c0_1] : memref<16x128xf32, #tpu.memory_space<vmem>>, vector<16x128xf32>
    %c0_2 = arith.constant 0 : index
    %c0_3 = arith.constant 0 : index
    %4 = vector.load %arg3[%c0_2, %c0_3] : memref<16x128xf32, #tpu.memory_space<vmem>>, vector<16x128xf32>
    %cst = arith.constant 9.99999997E-7 : f32
    %5 = vector.broadcast %cst : f32 to vector<16x128xf32>
    %6 = arith.addf %3, %5 : vector<16x128xf32>
    %7 = math.log %6 : vector<16x128xf32>
    %8 = arith.mulf %4, %7 : vector<16x128xf32>
    %cst_4 = arith.constant 1.000000e+00 : f32
    %9 = vector.broadcast %cst_4 : f32 to vector<16x128xf32>
    %10 = arith.subf %9, %4 : vector<16x128xf32>
    %cst_5 = arith.constant 1.000000e+00 : f32
    %11 = vector.broadcast %cst_5 : f32 to vector<16x128xf32>
    %12 = arith.subf %11, %3 : vector<16x128xf32>
    %cst_6 = arith.constant 9.99999997E-7 : f32
    %13 = vector.broadcast %cst_6 : f32 to vector<16x128xf32>
    %14 = arith.addf %12, %13 : vector<16x128xf32>
    %15 = math.log %14 : vector<16x128xf32>
    %16 = arith.mulf %10, %15 : vector<16x128xf32>
    %17 = arith.addf %8, %16 : vector<16x128xf32>
    %c0_7 = arith.constant 0 : index
    %c0_8 = arith.constant 0 : index
    %18 = vector.load %arg5[%c0_7, %c0_8] : memref<8x128xf32, #tpu.memory_space<vmem>>, vector<8x128xf32>
    %19 = vector.shape_cast %17 : vector<16x128xf32> to vector<2x8x128xf32>
    %cst_9 = arith.constant dense<0.000000e+00> : vector<8x128xf32>
    %20 = vector.multi_reduction <add>, %19, %cst_9 [0] : vector<2x8x128xf32> to vector<8x128xf32>
    %21 = arith.addf %18, %20 : vector<8x128xf32>
    %c0_10 = arith.constant 0 : index
    %c0_11 = arith.constant 0 : index
    %22 = vector.load %arg5[%c0_10, %c0_11] : memref<8x128xf32, #tpu.memory_space<vmem>>, vector<8x128xf32>
    tpu.vector_store %arg5[%c0_10, %c0_11], %21 {strides = array<i32>} : memref<8x128xf32, #tpu.memory_space<vmem>>, vector<8x128xf32>,
    %c0_i32_12 = arith.constant 0 : i32
    %23 = arith.cmpi eq, %arg1, %c0_i32_12 : i32
    %24 = arith.extui %23 : i1 to i32
    %c0_i32_13 = arith.constant 0 : i32
    %25 = arith.cmpi ne, %24, %c0_i32_13 : i32
    scf.if %25 {
      %c0_14 = arith.constant 0 : index
      %c0_15 = arith.constant 0 : index
      %26 = vector.load %arg5[%c0_14, %c0_15] : memref<8x128xf32, #tpu.memory_space<vmem>>, vector<8x128xf32>
      %27 = vector.shape_cast %26 : vector<8x128xf32> to vector<1x8x128xf32>
      %cst_16 = arith.constant dense<0.000000e+00> : vector<1xf32>
      %28 = vector.multi_reduction <add>, %27, %cst_16 [1, 2] : vector<1x8x128xf32> to vector<1xf32>
      %29 = vector.shape_cast %28 : vector<1xf32> to vector<1x1x1xf32>
      %30 = vector.extract %29[0, 0, 0] : f32 from vector<1x1x1xf32>
      %c0_17 = arith.constant 0 : index
      %c0_18 = arith.constant 0 : index
      %31 = memref.load %arg4[%c0_17, %c0_18] : memref<1x1xf32, #tpu.memory_space<smem>>
      memref.store %30, %arg4[%c0_17, %c0_18] : memref<1x1xf32, #tpu.memory_space<smem>>
    } else {
    }
    return
  }
  func.func @transform_0(%arg0: i32, %arg1: i32) -> (i32, i32) {
    %c1_i32 = arith.constant 1 : i32
    %0 = arith.muli %arg0, %c1_i32 : i32
    %1 = arith.addi %0, %arg1 : i32
    %c0_i32 = arith.constant 0 : i32
    %2 = arith.minsi %1, %c0_i32 : i32
    %c0_i32_0 = arith.constant 0 : i32
    %c0_i32_1 = arith.constant 0 : i32
    return %2, %c0_i32_0 : i32, i32
  }
  func.func @transform_1(%arg0: i32, %arg1: i32) -> (i32, i32) {
    %c1_i32 = arith.constant 1 : i32
    %0 = arith.muli %arg0, %c1_i32 : i32
    %1 = arith.addi %0, %arg1 : i32
    %c0_i32 = arith.constant 0 : i32
    %2 = arith.minsi %1, %c0_i32 : i32
    %c0_i32_0 = arith.constant 0 : i32
    %c0_i32_1 = arith.constant 0 : i32
    return %2, %c0_i32_0 : i32, i32
  }
  func.func @transform_2(%arg0: i32, %arg1: i32) -> (i32, i32) {
    %c0_i32 = arith.constant 0 : i32
    %c0_i32_0 = arith.constant 0 : i32
    return %arg0, %c0_i32 : i32, i32
  }
}

</mosaic_0001>

<llo_original>
// kernel: tpu_custom_call.1
$region0: #{tpu_custom_call.1}
  #allocation0 [shape = 'u32[]', space=smem, size = 0x4, offset = 0x4, fixed_abs, tag = 'smem constant byte address 0x4 - core index']
  #allocation1 [shape = 'u32[72,128]{1,0:T(1,128)}', space=vmem, size = 0x9000, scoped, tag = 'internal scratch']
  #allocation2 [shape = 'f32[8,128]{1,0:T(8,128)}', space=vmem, size = 0x1000, scoped, tag = 'scratch operand']
  %s0 = inlined_call_operand.hbm [shape: f32[16,128], index: 0, kind: input, shape index: {}]
  %s1 = inlined_call_operand.hbm [shape: f32[16,128], index: 1, kind: input, shape index: {}]
  %s2 = inlined_call_operand.hbm [shape: f32[1,1], index: 2, kind: output, shape index: {}]
  %s3 = sld [smem:[#allocation0]]
  $region34: #{tpu_custom_call.1} parent=0
    _
  %s5 = ssub.s32 1, %s3
  %s6 = scalar_select 0, %s5, %s3
  $region1: #{tpu_custom_call.1} parent=0
    #allocation3 [shape = 'u8[8192]{0}', space=vmem, size = 0x2000, scoped, tag = 'input window, operand 0, single buffered']
    #allocation4 [shape = 's32[1]{0}', space=sflag, size = 0x4, scoped, tag = 'scoped memory for tpu_custom_call.1']
    #allocation5 [shape = 's32[1]{0}', space=sflag, size = 0x4, scoped, tag = 'scoped memory for tpu_custom_call.1']
    #allocation6 [shape = 'u8[8192]{0}', space=vmem, size = 0x2000, scoped, tag = 'input window, operand 1, single buffered']
    #allocation7 [shape = 's32[1]{0}', space=sflag, size = 0x4, scoped, tag = 'scoped memory for tpu_custom_call.1']
    #allocation8 [shape = 'u8[512]{0}', space=smem, size = 0x200, scoped, tag = 'output window, operand 0, single buffered']
    %7 = vsyncpa [#allocation4], 0
    %8 = vsyncpa [#allocation7], 0
    %9 = vsyncpa [#allocation5], 0
    // Predicated region
    $region2: #{tpu_custom_call.1} parent=1 // pred_check
      _
    $region3: #{tpu_custom_call.1} parent=1 // pred_check_branch
      %11 = sbr.rel (0) target = $region5
    $region4: #{tpu_custom_call.1} parent=1 // pred_region
      %s12 = sadd.s32 0, 0
      %p13 = scmp.lt.s32.totalorder %s12, 0
      %s14 = scalar_select %p13, %s12, 0
      %s15 = smul.u32 2, %s14
      %17 = vsyncadd [#allocation4], 0
      %s18 = smul.addr %s15, 8
      %s19 = scalar_lea.hbm %s0, %s18
      %s20 = sshll.u32 %s19, 4
      %s21 = int_to_ptr.hbm [resolvable:$true] %s20
      %s22 = sshll.u32 [#allocation3], 4
      %s23 = int_to_ptr.vmem [resolvable:$true] %s22
      %28 = dma.hbm_to_vmem [thread:$0]  %s21, 256, %s23, [#allocation4], 128, 128, 8
    $region5: #{tpu_custom_call.1} parent=1 // pred_fallthru
      _
    // Predicated region
    $region6: #{tpu_custom_call.1} parent=1 // pred_check
      _
    $region7: #{tpu_custom_call.1} parent=1 // pred_check_branch
      %30 = sbr.rel (0) target = $region9
    $region8: #{tpu_custom_call.1} parent=1 // pred_region
      %s31 = sadd.s32 0, 0
      %p32 = scmp.lt.s32.totalorder %s31, 0
      %s33 = scalar_select %p32, %s31, 0
      %s34 = smul.u32 2, %s33
      %36 = vsyncadd [#allocation7], 0
      %s37 = smul.addr %s34, 8
      %s38 = scalar_lea.hbm %s1, %s37
      %s39 = sshll.u32 %s38, 4
      %s40 = int_to_ptr.hbm [resolvable:$true] %s39
      %s41 = sshll.u32 [#allocation6], 4
      %s42 = int_to_ptr.vmem [resolvable:$true] %s41
      %47 = dma.hbm_to_vmem [thread:$0]  %s40, 256, %s42, [#allocation7], 128, 128, 8
    $region9: #{tpu_custom_call.1} parent=1 // pred_fallthru
      _
    // Predicated region
    $region10: #{tpu_custom_call.1} parent=1 // pred_check
      _
    $region11: #{tpu_custom_call.1} parent=1 // pred_check_branch
      %49 = sbr.rel (0) target = $region13
    $region12: #{tpu_custom_call.1} parent=1 // pred_region
      %51 = dma.done [#allocation4], 256
    $region13: #{tpu_custom_call.1} parent=1 // pred_fallthru
      _
    // Predicated region
    $region14: #{tpu_custom_call.1} parent=1 // pred_check
      _
    $region15: #{tpu_custom_call.1} parent=1 // pred_check_branch
      %53 = sbr.rel (0) target = $region17
    $region16: #{tpu_custom_call.1} parent=1 // pred_region
      %55 = dma.done [#allocation7], 256
    $region17: #{tpu_custom_call.1} parent=1 // pred_fallthru
      _
    %s56 = sadd.s32 0, 0
    %p57 = scmp.lt.s32.totalorder %s56, 0
    %s58 = scalar_select %p57, %s56, 0
    %s59 = smul.u32 2, %s58
    %s60 = sadd.s32 0, 0
    %p61 = scmp.lt.s32.totalorder %s60, 0
    %s62 = scalar_select %p61, %s60, 0
    %s63 = smul.u32 2, %s62
    %p64 = scmp.eq.s32.totalorder 0, 0
    // Predicated region
    $region18: #{tpu_custom_call.1} parent=1 // pred_check
      %p65 = pneg %p64
    $region19: #{tpu_custom_call.1} parent=1 // pred_check_branch
      %67 = sbr.rel (%p65) target = $region21
    $region20: #{tpu_custom_call.1} parent=1 // pred_region
      %68 = vst [vmem:[#allocation2] sm:$0xff] 0.0
    $region21: #{tpu_custom_call.1} parent=1 // pred_fallthru
      _
    %v69 = vld [vmem:[#allocation3] sm:$0xff]
    %v70 = vld [vmem:[#allocation3 + $0x8] sm:$0xff]
    %v71 = vld [vmem:[#allocation6] sm:$0xff]
    %v72 = vld [vmem:[#allocation6 + $0x8] sm:$0xff]
    %v73 = vadd.f32 %v69, 1e-06
    %v74 = vadd.f32 %v70, 1e-06
    %v75 = vlog2.pop %v73
    %v76 = vmul.f32 %v75, 0.6931472
    %v77 = vlog2.pop %v74
    %v78 = vmul.f32 %v77, 0.6931472
    %v79 = vmul.f32 %v71, %v76
    %v80 = vmul.f32 %v72, %v78
    %v81 = vsub.f32 1.0, %v71
    %v82 = vsub.f32 1.0, %v72
    %v83 = vsub.f32 1.0, %v69
    %v84 = vsub.f32 1.0, %v70
    %v85 = vadd.f32 %v83, 1e-06
    %v86 = vadd.f32 %v84, 1e-06
    %v87 = vlog2.pop %v85
    %v88 = vmul.f32 %v87, 0.6931472
    %v89 = vlog2.pop %v86
    %v90 = vmul.f32 %v89, 0.6931472
    %v91 = vmul.f32 %v81, %v88
    %v92 = vmul.f32 %v82, %v90
    %v93 = vadd.f32 %v79, %v91
    %v94 = vadd.f32 %v80, %v92
    %v95 = vld [vmem:[#allocation2] sm:$0xff]
    %v96 = vadd.f32 %v93, %v94
    %v97 = vadd.f32 %v95, %v96
    %98 = vst [vmem:[#allocation2] sm:$0xff] %v97
    // Predicated region
    $region22: #{tpu_custom_call.1} parent=1 // pred_check
      %p99 = pneg %p64
    $region23: #{tpu_custom_call.1} parent=1 // pred_check_branch
      %101 = sbr.rel (%p99) target = $region25
    $region24: #{tpu_custom_call.1} parent=1 // pred_region
      %v102 = vld [vmem:[#allocation2] sm:$0xff]
      %103 = vadd.xlane.f32.xlu0 %v102
      %v104 = vpop.xlane.xlu0 %103
      %v105 = vrot.slane %v104, 4
      %v106 = vadd.f32 %v104, %v105
      %v107 = vrot.slane %v106, 2
      %v108 = vadd.f32 %v106, %v107
      %v109 = vrot.slane %v108, 1
      %v110 = vadd.f32 %v108, %v109
      %s111 = vtos %v110
      %s112 = scalar_lea.smem [#allocation8], 0
      %113 = sst [smem:[%s112]] %s111
    $region25: #{tpu_custom_call.1} parent=1 // pred_fallthru
      _
    // Predicated region
    $region26: #{tpu_custom_call.1} parent=1 // pred_check
      _
    $region27: #{tpu_custom_call.1} parent=1 // pred_check_branch
      %115 = sbr.rel (0) target = $region29
    $region28: #{tpu_custom_call.1} parent=1 // pred_region
      %117 = vsyncadd [#allocation5], 0
      %s119 = sshll.u32 %s2, 4
      %s120 = int_to_ptr.hbm [resolvable:$true] %s119
      %122 = dma.smem_to_hbm [#allocation8], 16, %s120, [#allocation5]
    $region29: #{tpu_custom_call.1} parent=1 // pred_fallthru
      _
    // Predicated region
    $region30: #{tpu_custom_call.1} parent=1 // pred_check
      _
    $region31: #{tpu_custom_call.1} parent=1 // pred_check_branch
      %124 = sbr.rel (0) target = $region33
    $region32: #{tpu_custom_call.1} parent=1 // pred_region
      %126 = dma.done [#allocation5], 16
    $region33: #{tpu_custom_call.1} parent=1 // pred_fallthru
      _
    %127 = sfence
    %128 = vsyncpa [#allocation4], 1
    %129 = vsyncpa [#allocation7], 1
    %130 = vsyncpa [#allocation5], 1

</llo_original>
